<compile_context>
chip_gen: v7x
topology: tpu7x:2x2x1
jax: 0.10.0
libtpu: 0.0.40
codegen_flags: <defaults>
</compile_context>

<pallas_src>
import jax
import jax.numpy as jnp
from jax import lax
from jax.experimental import pallas as pl
from jax.experimental.pallas import tpu as pltpu


def _round_up(x, m):
    return ((x + m - 1) // m) * m


# ----------------------------- Encoder kernel ------------------------------ #
def _encoder_kernel(x_ref, w_ref, b_ref, o_ref, acc_ref):
    # grid over the contraction (K) axis; f32 accumulator in VMEM.
    k = pl.program_id(0)

    @pl.when(k == 0)
    def _():
        acc_ref[...] = jnp.zeros_like(acc_ref)

    acc_ref[...] += jnp.dot(x_ref[...], w_ref[...],
                            preferred_element_type=jnp.float32)

    @pl.when(k == pl.num_programs(0) - 1)
    def _():
        o_ref[...] = acc_ref[...] + b_ref[...]


def encoder_forward(x_flat, w_enc, b_enc):
    """x_flat: (B_pad, K) f32; w_enc: (K, E_pad) precomposed backbone+fc; b_enc: (1, E_pad)."""
    Bp, K = x_flat.shape
    Ep = w_enc.shape[1]
    tk = K
    for cand in (512, 256, 128):
        if K % cand == 0:
            tk = cand
            break
    return pl.pallas_call(
        _encoder_kernel,
        out_shape=jax.ShapeDtypeStruct((Bp, Ep), jnp.float32),
        grid=(K // tk,),
        in_specs=[
            pl.BlockSpec((Bp, tk), lambda k: (0, k)),   # image rows, K-tile
            pl.BlockSpec((tk, Ep), lambda k: (k, 0)),   # precomposed weight K-tile
            pl.BlockSpec((1, Ep), lambda k: (0, 0)),    # bias (resident)
        ],
        out_specs=pl.BlockSpec((Bp, Ep), lambda k: (0, 0)),
        scratch_shapes=[pltpu.VMEM((Bp, Ep), jnp.float32)],
        compiler_params=pltpu.CompilerParams(dimension_semantics=("arbitrary",)),
    )(x_flat, w_enc, b_enc)


# --------------- Decoder RNN (2 layers, relu) + fc, one invocation ---------- #
def _rnn_fc_kernel(x_ref, w0_ref, b0_ref, w1_ref, b1_ref, wfc_ref, bfc_ref,
                   out_ref, h_all_ref):
    # x_ref:    (T, B_pad, E_pad)   time-major input (image feature at t=0)
    # w0/w1:    (E_pad+H_pad, H_pad) / (2*H_pad, H_pad)  fused [W_ih^T; W_hh^T]
    # wfc:      (H_pad, V_pad)
    # out_ref:  (T*B_pad, V_pad)
    # h_all_ref: VMEM scratch (T*B_pad, H_pad) holding layer-1 hidden states
    T, Bp, _ = x_ref.shape
    Hp = w0_ref.shape[1]

    def step(t, carry):
        h0, h1 = carry
        x_t = x_ref[t]                                           # (Bp, E_pad)
        # layer 0: fused [x, h_prev] @ [[W_ih^T],[W_hh^T]] + (b_ih+b_hh), relu
        h0n = jnp.maximum(
            jnp.dot(jnp.concatenate([x_t, h0], axis=1), w0_ref[...],
                    preferred_element_type=jnp.float32) + b0_ref[...], 0.0)
        # layer 1
        h1n = jnp.maximum(
            jnp.dot(jnp.concatenate([h0n, h1], axis=1), w1_ref[...],
                    preferred_element_type=jnp.float32) + b1_ref[...], 0.0)
        row = pl.multiple_of(t * Bp, Bp)
        h_all_ref[pl.ds(row, Bp), :] = h1n
        return (h0n, h1n)

    h_init = jnp.zeros((Bp, Hp), jnp.float32)
    lax.fori_loop(0, T, step, (h_init, h_init), unroll=True)

    # vocab projection hoisted out of the recurrence: one MXU-shaped matmul.
    out_ref[...] = (
        jnp.dot(h_all_ref[...], wfc_ref[...],
                preferred_element_type=jnp.float32) + bfc_ref[...]
    )


def rnn_fc_forward(x_tbe, kp):
    T, Bp, _ = x_tbe.shape
    Hp = kp["w0"].shape[1]
    Vp = kp["wfc"].shape[1]
    vmem_spec = pl.BlockSpec(memory_space=pltpu.MemorySpace.VMEM)
    return pl.pallas_call(
        _rnn_fc_kernel,
        out_shape=jax.ShapeDtypeStruct((T * Bp, Vp), jnp.float32),
        in_specs=[vmem_spec] * 7,
        out_specs=vmem_spec,
        scratch_shapes=[pltpu.VMEM((T * Bp, Hp), jnp.float32)],
    )(x_tbe, kp["w0"], kp["b0"], kp["w1"], kp["b1"], kp["wfc"], kp["bfc"])


# ------------------------------- Full forward ------------------------------ #
def vanilla_rnn_forward(images, captions, kp):
    B = images.shape[0]
    T = captions.shape[1]           # seq len = 1 (image feature) + (cap_len-1) words
    V = kp["vocab_size"]
    Bp = _round_up(B, 8)            # full f32 sublane tile

    # Encoder: flatten NCHW, pad batch to B_pad, single precomposed matmul.
    x_flat = images.reshape(B, -1).astype(jnp.float32)
    x_flat = jnp.pad(x_flat, ((0, Bp - B), (0, 0)))
    features = encoder_forward(x_flat, kp["w_enc"], kp["b_enc"])    # (Bp, E_pad)

    # Decoder inputs built directly time-major and pre-padded (glue ops).
    caps = jnp.pad(captions[:, :-1], ((0, Bp - B), (0, 0)))         # (Bp, T-1)
    emb_tm = jnp.take(kp["embedding"], caps.T, axis=0)              # (T-1, Bp, E_pad)
    x_tbe = jnp.concatenate([features[None], emb_tm], axis=0)       # (T, Bp, E_pad)

    # 2-layer ReLU RNN + vocab fc in one Pallas invocation.
    out2d = rnn_fc_forward(x_tbe, kp)                               # (T*Bp, V_pad)
    out = out2d.reshape(T, Bp, -1)
    return jnp.transpose(out, (1, 0, 2))[:B, :, :V]                 # (B, T, V)


# ------------------------------ Param creation ------------------------------ #
def make_params(key, embed_dim, num_embeds, hidden_size, num_ftrs, img_flat):
    ks = jax.random.split(key, 12)
    k_rnn = 1.0 / jnp.sqrt(hidden_size)
    k_enc = 1.0 / jnp.sqrt(num_ftrs)
    k_fc = 1.0 / jnp.sqrt(hidden_size)

    def unif(k, shape, scale):
        return jax.random.uniform(k, shape, jnp.float32, -scale, scale)

    b_ih0 = unif(ks[0], (hidden_size,), k_rnn)
    b_hh0 = unif(ks[1], (hidden_size,), k_rnn)
    b_ih1 = unif(ks[2], (hidden_size,), k_rnn)
    b_hh1 = unif(ks[3], (hidden_size,), k_rnn)

    return {
        # encoder (ResNet50 backbone stand-in + encoder.fc)
        "w_backbone": unif(ks[4], (img_flat, num_ftrs), 1.0 / jnp.sqrt(img_flat)),
        "w_enc_fc": unif(ks[5], (num_ftrs, embed_dim), k_enc),
        "b_enc_fc": unif(ks[6], (embed_dim,), k_enc),
        # decoder embedding (torch nn.Embedding ~ N(0,1))
        "embedding": jax.random.normal(ks[7], (num_embeds, embed_dim), jnp.float32),
        # decoder 2-layer ReLU RNN (weights stored pre-transposed: (in, out))
        "wih0": unif(ks[8], (embed_dim, hidden_size), k_rnn),
        "whh0": unif(ks[9], (hidden_size, hidden_size), k_rnn),
        "b0": (b_ih0 + b_hh0).reshape(1, hidden_size),
        "wih1": unif(ks[10], (hidden_size, hidden_size), k_rnn),
        "whh1": unif(ks[11], (hidden_size, hidden_size), k_rnn),
        "b1": (b_ih1 + b_hh1).reshape(1, hidden_size),
        # decoder.fc
        "wfc": unif(jax.random.fold_in(key, 100), (hidden_size, num_embeds), k_fc),
        "bfc": unif(jax.random.fold_in(key, 101), (num_embeds,), k_fc).reshape(1, num_embeds),
    }


def prepare_kernel_params(p, embed_dim, hidden_size, num_embeds):
    """One-time weight prep: zero-pad to (8,128)-tile-friendly shapes, fuse
    [W_ih; W_hh] per layer, and precompose backbone @ encoder.fc."""
    E_pad = _round_up(embed_dim, 128)
    H_pad = _round_up(hidden_size, 128)
    V_pad = _round_up(num_embeds, 128)

    def pad2(a, r, c):
        return jnp.pad(a, ((0, r - a.shape[0]), (0, c - a.shape[1])))

    # Encoder: no nonlinearity between backbone projection and fc -> compose.
    w_enc_fc_pad = pad2(p["w_enc_fc"], p["w_enc_fc"].shape[0], E_pad)
    w_enc = jnp.dot(p["w_backbone"], w_enc_fc_pad)                  # (img_flat, E_pad)
    b_enc = pad2(p["b_enc_fc"].reshape(1, -1), 1, E_pad)

    return {
        "w_enc": w_enc,
        "b_enc": b_enc,
        "embedding": pad2(p["embedding"], p["embedding"].shape[0], E_pad),
        "w0": jnp.concatenate(
            [pad2(p["wih0"], E_pad, H_pad), pad2(p["whh0"], H_pad, H_pad)], axis=0),
        "b0": pad2(p["b0"], 1, H_pad),
        "w1": jnp.concatenate(
            [pad2(p["wih1"], H_pad, H_pad), pad2(p["whh1"], H_pad, H_pad)], axis=0),
        "b1": pad2(p["b1"], 1, H_pad),
        "wfc": pad2(p["wfc"], H_pad, V_pad),
        "bfc": pad2(p["bfc"], 1, V_pad),
        "vocab_size": num_embeds,
    }


if __name__ == "__main__":
    B, C, HW = 2, 3, 16
    embed_dim, num_embeds, hidden_size = 32, 64, 32
    num_ftrs = 2048          # ResNet50 fc.in_features
    cap_len = 9              # captions length -> seq length T = 1 + (cap_len - 1)

    key = jax.random.PRNGKey(0)
    k_img, k_cap, k_par = jax.random.split(key, 3)

    images = jax.random.normal(k_img, (B, C, HW, HW), jnp.float32)
    captions = jax.random.randint(k_cap, (B, cap_len), 4, num_embeds, jnp.int32)
    params = make_params(k_par, embed_dim, num_embeds, hidden_size,
                         num_ftrs, C * HW * HW)
    kparams = prepare_kernel_params(params, embed_dim, hidden_size, num_embeds)

    logits = vanilla_rnn_forward(images, captions, kparams)
    jax.block_until_ready(logits)
    assert logits.shape == (B, cap_len, num_embeds)
    print("KERNEL_OK")
</pallas_src>

<mosaic_0001>
module attributes {stable_mosaic.version = 11 : i64} {
  func.func @_encoder_kernel(%arg0: i32, %arg1: memref<8x256xf32, #tpu.memory_space<vmem>>, %arg2: memref<256x128xf32, #tpu.memory_space<vmem>>, %arg3: memref<1x128xf32, #tpu.memory_space<vmem>>, %arg4: memref<8x128xf32, #tpu.memory_space<vmem>>, %arg5: memref<8x128xf32, #tpu.memory_space<vmem>>) attributes {dimension_semantics = [#tpu.dimension_semantics<arbitrary>], iteration_bounds = array<i64: 3>, scalar_prefetch = 0 : i64, scratch_operands = 1 : i64, tpu.core_type = #tpu.core_type<tc>, window_params = [{transform_indices = @transform_0, window_bounds = array<i64: 8, 256>}, {transform_indices = @transform_1, window_bounds = array<i64: 256, 128>}, {pipeline_mode = #tpu.pipeline_mode<synchronous>, transform_indices = @transform_2, window_bounds = array<i64: 1, 128>}, {pipeline_mode = #tpu.pipeline_mode<synchronous>, transform_indices = @transform_3, window_bounds = array<i64: 8, 128>}]} {
    %c0_i32 = arith.constant 0 : i32
    %0 = arith.cmpi eq, %arg0, %c0_i32 : i32
    %1 = arith.extui %0 : i1 to i32
    %c0_i32_0 = arith.constant 0 : i32
    %2 = arith.cmpi ne, %1, %c0_i32_0 : i32
    scf.if %2 {
      %cst_9 = arith.constant 0.000000e+00 : f32
      %12 = vector.broadcast %cst_9 : f32 to vector<8x128xf32>
      %c0_10 = arith.constant 0 : index
      %c0_11 = arith.constant 0 : index
      %13 = vector.load %arg5[%c0_10, %c0_11] : memref<8x128xf32, #tpu.memory_space<vmem>>, vector<8x128xf32>
      tpu.vector_store %arg5[%c0_10, %c0_11], %12 {strides = array<i32>} : memref<8x128xf32, #tpu.memory_space<vmem>>, vector<8x128xf32>,
    } else {
    }
    %c0 = arith.constant 0 : index
    %c0_1 = arith.constant 0 : index
    %3 = vector.load %arg5[%c0, %c0_1] : memref<8x128xf32, #tpu.memory_space<vmem>>, vector<8x128xf32>
    %c0_2 = arith.constant 0 : index
    %c0_3 = arith.constant 0 : index
    %4 = vector.load %arg1[%c0_2, %c0_3] : memref<8x256xf32, #tpu.memory_space<vmem>>, vector<8x256xf32>
    %c0_4 = arith.constant 0 : index
    %c0_5 = arith.constant 0 : index
    %5 = vector.load %arg2[%c0_4, %c0_5] : memref<256x128xf32, #tpu.memory_space<vmem>>, vector<256x128xf32>
    %cst = arith.constant dense<0.000000e+00> : vector<8x128xf32>
    %6 = tpu.matmul %4, %5, %cst {dimension_numbers = #tpu.dot_dimension_numbers<[1], [0], [0], [1], [0, 0, 1, 1], [], []>} : vector<8x256xf32>, vector<256x128xf32>, vector<8x128xf32> -> vector<8x128xf32>
    %7 = arith.addf %3, %6 : vector<8x128xf32>
    %c0_6 = arith.constant 0 : index
    %c0_7 = arith.constant 0 : index
    %8 = vector.load %arg5[%c0_6, %c0_7] : memref<8x128xf32, #tpu.memory_space<vmem>>, vector<8x128xf32>
    tpu.vector_store %arg5[%c0_6, %c0_7], %7 {strides = array<i32>} : memref<8x128xf32, #tpu.memory_space<vmem>>, vector<8x128xf32>,
    %c2_i32 = arith.constant 2 : i32
    %9 = arith.cmpi eq, %arg0, %c2_i32 : i32
    %10 = arith.extui %9 : i1 to i32
    %c0_i32_8 = arith.constant 0 : i32
    %11 = arith.cmpi ne, %10, %c0_i32_8 : i32
    scf.if %11 {
      %c0_9 = arith.constant 0 : index
      %c0_10 = arith.constant 0 : index
      %12 = vector.load %arg5[%c0_9, %c0_10] : memref<8x128xf32, #tpu.memory_space<vmem>>, vector<8x128xf32>
      %c0_11 = arith.constant 0 : index
      %c0_12 = arith.constant 0 : index
      %13 = vector.load %arg3[%c0_11, %c0_12] : memref<1x128xf32, #tpu.memory_space<vmem>>, vector<1x128xf32>
      %14 = vector.broadcast %13 : vector<1x128xf32> to vector<8x128xf32>
      %15 = arith.addf %12, %14 : vector<8x128xf32>
      %c0_13 = arith.constant 0 : index
      %c0_14 = arith.constant 0 : index
      %16 = vector.load %arg4[%c0_13, %c0_14] : memref<8x128xf32, #tpu.memory_space<vmem>>, vector<8x128xf32>
      tpu.vector_store %arg4[%c0_13, %c0_14], %15 {strides = array<i32>} : memref<8x128xf32, #tpu.memory_space<vmem>>, vector<8x128xf32>,
    } else {
    }
    return
  }
  func.func @transform_0(%arg0: i32) -> (i32, i32) {
    %c0_i32 = arith.constant 0 : i32
    %c0_i32_0 = arith.constant 0 : i32
    return %c0_i32, %arg0 : i32, i32
  }
  func.func @transform_1(%arg0: i32) -> (i32, i32) {
    %c0_i32 = arith.constant 0 : i32
    %c0_i32_0 = arith.constant 0 : i32
    return %arg0, %c0_i32 : i32, i32
  }
  func.func @transform_2(%arg0: i32) -> (i32, i32) {
    %c0_i32 = arith.constant 0 : i32
    %c0_i32_0 = arith.constant 0 : i32
    %c0_i32_1 = arith.constant 0 : i32
    return %c0_i32, %c0_i32_0 : i32, i32
  }
  func.func @transform_3(%arg0: i32) -> (i32, i32) {
    %c0_i32 = arith.constant 0 : i32
    %c0_i32_0 = arith.constant 0 : i32
    %c0_i32_1 = arith.constant 0 : i32
    return %c0_i32, %c0_i32_0 : i32, i32
  }
}

</mosaic_0001>

<llo_original>
// kernel: tpu_custom_call.1
$region0: #{tpu_custom_call.1}
  #allocation0 [shape = 'u32[]', space=smem, size = 0x4, offset = 0x4, fixed_abs, tag = 'smem constant byte address 0x4 - core index']
  #allocation1 [shape = 'u32[144,128]{1,0:T(1,128)}', space=vmem, size = 0x12000, scoped, tag = 'internal scratch']
  #allocation2 [shape = 'f32[8,128]{1,0:T(8,128)}', space=vmem, size = 0x1000, scoped, tag = 'scratch operand']
  %s0 = inlined_call_operand.hbm [shape: f32[8,768], index: 0, kind: input, shape index: {}]
  %s1 = inlined_call_operand.hbm [shape: f32[768,128], index: 1, kind: input, shape index: {}]
  %s2 = inlined_call_operand.vmem [shape: f32[1,128], index: 2, kind: input, shape index: {}]
  %s3 = inlined_call_operand.hbm [shape: f32[8,128], index: 3, kind: output, shape index: {}]
  %s4 = sld [smem:[#allocation0]]
  $region61: #{tpu_custom_call.1} parent=0
    _
  %s6 = ssub.s32 1, %s4
  %s7 = scalar_select 0, %s6, %s4
  $region1: #{tpu_custom_call.1} parent=0
    #allocation3 [shape = 'u8[16384]{0}', space=vmem, size = 0x4000, scoped, tag = 'input window, operand 0']
    #allocation4 [shape = 's32[2]{0}', space=sflag, size = 0x8, scoped, tag = 'scoped memory for tpu_custom_call.1']
    #allocation5 [shape = 's32[2]{0}', space=sflag, size = 0x8, scoped, tag = 'scoped memory for tpu_custom_call.1']
    #allocation6 [shape = 'u8[262144]{0}', space=vmem, size = 0x40000, scoped, tag = 'input window, operand 1']
    #allocation7 [shape = 's32[2]{0}', space=sflag, size = 0x8, scoped, tag = 'scoped memory for tpu_custom_call.1']
    #allocation8 [shape = 'u8[4096]{0}', space=vmem, size = 0x1000, scoped, tag = 'output window, operand 0, single buffered']
    %8 = vsyncpa [#allocation4], 0
    %s9 = scalar_lea.sflag [#allocation4], 1
    %10 = vsyncpa %s9, 0
    %11 = vsyncpa [#allocation7], 0
    %s12 = scalar_lea.sflag [#allocation7], 1
    %13 = vsyncpa %s12, 0
    %14 = vsyncpa [#allocation5], 0
    loop: start=0, step=1, limit=5
    $region2: #{tpu_custom_call.1} parent=1 // loop_pre_header
      _
    $region3: #{tpu_custom_call.1} parent=1 // loop_header
      %s16 = sphi 0, %s20
      %p17 = scmp.ge.s32.totalorder %s16, 5
      %s26 = sphi 0, %s28
      %s29 = sphi 0, %s26
      %s30 = sphi 0, %s29
      %s46 = sphi 0, %s30
      %s52 = sphi 0, %s54
      %s55 = sphi 0, %s52
      %s56 = sphi 0, %s55
      %s72 = sphi 0, %s56
      %s76 = sphi 0, %s76
      %s78 = sphi 0, %s76
      %s79 = sphi 0, %s78
      %s93 = sphi 0, %s79
      %s97 = sphi 0, %s97
      %s99 = sphi 0, %s97
      %s100 = sphi 0, %s99
      %s114 = sphi 0, %s100
    $region4: #{tpu_custom_call.1} parent=1 // loop_header_branch
      %19 = sbr.rel (%p17) target = $region8
    $region5: #{tpu_custom_call.1} parent=1 // loop_body
      %s21 = ssub.s32 %s16, 1
      %s22 = ssub.s32 %s16, 2
      %s23 = sadd.s32 %s16, 1
      %s24 = ssub.s32 %s16, %s23
      %p25 = scmp.eq.s32.totalorder %s24, 0
      %s27 = sadd.s32 %s26, 1
      %s28 = scalar_select %p25, %s26, %s27
      %p31 = pneg %p25
      %p32 = scmp.eq.s32.totalorder %s16, 2
      %p33 = por %p31, %p32
      %p34 = scmp.ne.s32.totalorder %s26, %s29
      %p35 = scmp.eq.s32.totalorder %s16, 0
      %p36 = por %p34, %p35
      %p37 = scmp.ne.s32.totalorder %s26, %s29
      %p38 = scmp.eq.s32.totalorder %s21, 2
      %p39 = por %p37, %p38
      %p40 = scmp.ne.s32.totalorder %s29, %s30
      %p41 = scmp.eq.s32.totalorder %s21, 0
      %p42 = por %p40, %p41
      %p43 = scmp.ne.s32.totalorder %s29, %s30
      %p44 = scmp.eq.s32.totalorder %s22, 2
      %p45 = por %p43, %p44
      %p47 = scmp.ne.s32.totalorder %s30, %s46
      %p48 = scmp.eq.s32.totalorder %s22, 0
      %p49 = por %p47, %p48
      %s50 = ssub.s32 %s16, %s23
      %p51 = scmp.eq.s32.totalorder %s50, 0
      %s53 = sadd.s32 %s52, 1
      %s54 = scalar_select %p51, %s52, %s53
      %p57 = pneg %p51
      %p58 = scmp.eq.s32.totalorder %s16, 2
      %p59 = por %p57, %p58
      %p60 = scmp.ne.s32.totalorder %s52, %s55
      %p61 = scmp.eq.s32.totalorder %s16, 0
      %p62 = por %p60, %p61
      %p63 = scmp.ne.s32.totalorder %s52, %s55
      %p64 = scmp.eq.s32.totalorder %s21, 2
      %p65 = por %p63, %p64
      %p66 = scmp.ne.s32.totalorder %s55, %s56
      %p67 = scmp.eq.s32.totalorder %s21, 0
      %p68 = por %p66, %p67
      %p69 = scmp.ne.s32.totalorder %s55, %s56
      %p70 = scmp.eq.s32.totalorder %s22, 2
      %p71 = por %p69, %p70
      %p73 = scmp.ne.s32.totalorder %s56, %s72
      %p74 = scmp.eq.s32.totalorder %s22, 0
      %p75 = por %p73, %p74
      %s77 = sadd.s32 %s76, 1
      %p80 = scmp.eq.s32.totalorder %s16, 2
      %p81 = scmp.ne.s32.totalorder %s76, %s78
      %p82 = scmp.eq.s32.totalorder %s16, 0
      %p83 = por %p81, %p82
      %p84 = scmp.ne.s32.totalorder %s76, %s78
      %p85 = scmp.eq.s32.totalorder %s21, 2
      %p86 = por %p84, %p85
      %p87 = scmp.ne.s32.totalorder %s78, %s79
      %p88 = scmp.eq.s32.totalorder %s21, 0
      %p89 = por %p87, %p88
      %p90 = scmp.ne.s32.totalorder %s78, %s79
      %p91 = scmp.eq.s32.totalorder %s22, 2
      %p92 = por %p90, %p91
      %p94 = scmp.ne.s32.totalorder %s79, %s93
      %p95 = scmp.eq.s32.totalorder %s22, 0
      %p96 = por %p94, %p95
      %s98 = sadd.s32 %s97, 1
      %p101 = scmp.eq.s32.totalorder %s16, 2
      %p102 = scmp.ne.s32.totalorder %s97, %s99
      %p103 = scmp.eq.s32.totalorder %s16, 0
      %p104 = por %p102, %p103
      %p105 = scmp.ne.s32.totalorder %s97, %s99
      %p106 = scmp.eq.s32.totalorder %s21, 2
      %p107 = por %p105, %p106
      %p108 = scmp.ne.s32.totalorder %s99, %s100
      %p109 = scmp.eq.s32.totalorder %s21, 0
      %p110 = por %p108, %p109
      %p111 = scmp.ne.s32.totalorder %s99, %s100
      %p112 = scmp.eq.s32.totalorder %s22, 2
      %p113 = por %p111, %p112
      %p115 = scmp.ne.s32.totalorder %s100, %s114
      %p116 = scmp.eq.s32.totalorder %s22, 0
      %p117 = por %p115, %p116
      %p118 = scmp.le.s32.totalorder 1, %s16
      %p119 = scmp.lt.s32.totalorder %s16, 4
      %p120 = pnand %p118, %p119
      %p121 = pneg %p120
      // Predicated region
      $region9: #{tpu_custom_call.1} parent=5 // pred_check
        _
      $region10: #{tpu_custom_call.1} parent=5 // pred_check_branch
        %123 = sbr.rel (%p120) target = $region12
      $region11: #{tpu_custom_call.1} parent=5 // pred_region
        %s124 = ssub.s32 %s16, 1
        // Predicated region
        $region13: #{tpu_custom_call.1} parent=11 // pred_check
          %p125 = pneg %p89
        $region14: #{tpu_custom_call.1} parent=11 // pred_check_branch
          %127 = sbr.rel (%p125) target = $region16
        $region15: #{tpu_custom_call.1} parent=11 // pred_region
          _
        $region16: #{tpu_custom_call.1} parent=11 // pred_fallthru
          _
      $region12: #{tpu_custom_call.1} parent=5 // pred_fallthru
        _
      %p128 = scmp.lt.s32.totalorder %s16, 3
      // Predicated region
      $region17: #{tpu_custom_call.1} parent=5 // pred_check
        %p129 = pneg %p128
      $region18: #{tpu_custom_call.1} parent=5 // pred_check_branch
        %131 = sbr.rel (%p129) target = $region20
      $region19: #{tpu_custom_call.1} parent=5 // pred_region
        // Predicated region
        $region21: #{tpu_custom_call.1} parent=19 // pred_check
          %p132 = pneg %p36
        $region22: #{tpu_custom_call.1} parent=19 // pred_check_branch
          %134 = sbr.rel (%p132) target = $region24
        $region23: #{tpu_custom_call.1} parent=19 // pred_region
          %s135 = sand.u32 %s26, 1
          %s136 = scalar_lea.sflag [#allocation4], %s135
          %s137 = sand.u32 %s26, 1
          %s138 = smul.addr %s137, 16
          %s139 = scalar_lea.vmem [#allocation3], %s138
          %s140 = smul.u32 2, %s16
          %s142 = ssub.s32 256, 256
          %143 = vsyncadd %s136, %s142
          %s144 = smul.addr %s140, 128
          %s145 = scalar_lea.hbm %s0, %s144
          %s147 = sshll.u32 %s139, 4
          %s148 = int_to_ptr.vmem [resolvable:$true] %s147
          %150 = dma.hbm_to_vmem [thread:$0]  %s145, 256, %s148, %s136
        $region24: #{tpu_custom_call.1} parent=19 // pred_fallthru
          _
        // Predicated region
        $region25: #{tpu_custom_call.1} parent=19 // pred_check
          %p151 = pneg %p62
        $region26: #{tpu_custom_call.1} parent=19 // pred_check_branch
          %153 = sbr.rel (%p151) target = $region28
        $region27: #{tpu_custom_call.1} parent=19 // pred_region
          %s154 = sand.u32 %s52, 1
          %s155 = scalar_lea.sflag [#allocation7], %s154
          %s156 = sand.u32 %s52, 1
          %s157 = smul.addr %s156, 256
          %s158 = scalar_lea.vmem [#allocation6], %s157
          %s159 = smul.u32 32, %s16
          %s161 = ssub.s32 4096, 4096
          %162 = vsyncadd %s155, %s161
          %s163 = smul.addr %s159, 128
          %s164 = scalar_lea.hbm %s1, %s163
          %s165 = sshll.u32 %s158, 4
          %s166 = int_to_ptr.vmem [resolvable:$true] %s165
          %171 = dma.hbm_to_vmem [thread:$0]  %s164, 4096, %s166, %s155, 128, 128, 8
        $region28: #{tpu_custom_call.1} parent=19 // pred_fallthru
          _
      $region20: #{tpu_custom_call.1} parent=5 // pred_fallthru
        _
      %p172 = scmp.le.s32.totalorder 1, %s16
      %p173 = scmp.lt.s32.totalorder %s16, 4
      %p174 = pnand %p172, %p173
      %p175 = pneg %p174
      // Predicated region
      $region29: #{tpu_custom_call.1} parent=5 // pred_check
        _
      $region30: #{tpu_custom_call.1} parent=5 // pred_check_branch
        %177 = sbr.rel (%p174) target = $region32
      $region31: #{tpu_custom_call.1} parent=5 // pred_region
        %s178 = ssub.s32 %s16, 1
        %s179 = sand.u32 %s29, 1
        %s180 = scalar_lea.sflag [#allocation4], %s179
        %s181 = sand.u32 %s29, 1
        %s182 = smul.addr %s181, 16
        %s183 = scalar_lea.vmem [#allocation3], %s182
        // Predicated region
        $region33: #{tpu_custom_call.1} parent=31 // pred_check
          %p184 = pneg %p42
        $region34: #{tpu_custom_call.1} parent=31 // pred_check_branch
          %186 = sbr.rel (%p184) target = $region36
        $region35: #{tpu_custom_call.1} parent=31 // pred_region
          %187 = dma.done %s180, 256
        $region36: #{tpu_custom_call.1} parent=31 // pred_fallthru
          _
        %s188 = sand.u32 %s55, 1
        %s189 = scalar_lea.sflag [#allocation7], %s188
        %s190 = sand.u32 %s55, 1
        %s191 = smul.addr %s190, 256
        %s192 = scalar_lea.vmem [#allocation6], %s191
        // Predicated region
        $region37: #{tpu_custom_call.1} parent=31 // pred_check
          %p193 = pneg %p68
        $region38: #{tpu_custom_call.1} parent=31 // pred_check_branch
          %195 = sbr.rel (%p193) target = $region40
        $region39: #{tpu_custom_call.1} parent=31 // pred_region
          %196 = dma.done %s189, 4096
        $region40: #{tpu_custom_call.1} parent=31 // pred_fallthru
          _
        %s197 = sand.u32 %s29, 1
        %s198 = scalar_lea.sflag [#allocation4], %s197
        %s199 = sand.u32 %s29, 1
        %s200 = smul.addr %s199, 16
        %s201 = scalar_lea.vmem [#allocation3], %s200
        %p202 = pneg %p42
        %p203 = pneg %p39
        %s204 = sand.u32 %s55, 1
        %s205 = scalar_lea.sflag [#allocation7], %s204
        %s206 = sand.u32 %s55, 1
        %s207 = smul.addr %s206, 256
        %s208 = scalar_lea.vmem [#allocation6], %s207
        %p209 = pneg %p68
        %p210 = pneg %p65
        %p211 = pneg %p89
        %p212 = pneg %p86
        %p213 = pneg %p110
        %p214 = pneg %p107
        %s215 = smul.u32 2, %s21
        %s216 = smul.u32 32, %s21
        %p217 = scmp.eq.s32.totalorder %s21, 0
        // Predicated region
        $region41: #{tpu_custom_call.1} parent=31 // pred_check
          %p218 = pneg %p217
        $region42: #{tpu_custom_call.1} parent=31 // pred_check_branch
          %220 = sbr.rel (%p218) target = $region44
        $region43: #{tpu_custom_call.1} parent=31 // pred_region
          %221 = vst [vmem:[#allocation2] sm:$0xff] 0.0
        $region44: #{tpu_custom_call.1} parent=31 // pred_fallthru
          _
        %v222 = vld [vmem:[#allocation2] sm:$0xff]
        %v223 = vld [vmem:[%s183] sm:$0xff]
        %v224 = vld [vmem:[%s183 + $0x8] sm:$0xff]
        %v225 = vld [vmem:[%s192] sm:$0xff]
        %v226 = vld [vmem:[%s192 + $0x8] sm:$0xff]
        %v227 = vld [vmem:[%s192 + $0x10] sm:$0xff]
        %v228 = vld [vmem:[%s192 + $0x18] sm:$0xff]
        %v229 = vld [vmem:[%s192 + $0x20] sm:$0xff]
        %v230 = vld [vmem:[%s192 + $0x28] sm:$0xff]
        %v231 = vld [vmem:[%s192 + $0x30] sm:$0xff]
        %v232 = vld [vmem:[%s192 + $0x38] sm:$0xff]
        %v233 = vld [vmem:[%s192 + $0x40] sm:$0xff]
        %v234 = vld [vmem:[%s192 + $0x48] sm:$0xff]
        %v235 = vld [vmem:[%s192 + $0x50] sm:$0xff]
        %v236 = vld [vmem:[%s192 + $0x58] sm:$0xff]
        %v237 = vld [vmem:[%s192 + $0x60] sm:$0xff]
        %v238 = vld [vmem:[%s192 + $0x68] sm:$0xff]
        %v239 = vld [vmem:[%s192 + $0x70] sm:$0xff]
        %v240 = vld [vmem:[%s192 + $0x78] sm:$0xff]
        %v241 = vld [vmem:[%s192 + $0x80] sm:$0xff]
        %v242 = vld [vmem:[%s192 + $0x88] sm:$0xff]
        %v243 = vld [vmem:[%s192 + $0x90] sm:$0xff]
        %v244 = vld [vmem:[%s192 + $0x98] sm:$0xff]
        %v245 = vld [vmem:[%s192 + $0xa0] sm:$0xff]
        %v246 = vld [vmem:[%s192 + $0xa8] sm:$0xff]
        %v247 = vld [vmem:[%s192 + $0xb0] sm:$0xff]
        %v248 = vld [vmem:[%s192 + $0xb8] sm:$0xff]
        %v249 = vld [vmem:[%s192 + $0xc0] sm:$0xff]
        %v250 = vld [vmem:[%s192 + $0xc8] sm:$0xff]
        %v251 = vld [vmem:[%s192 + $0xd0] sm:$0xff]
        %v252 = vld [vmem:[%s192 + $0xd8] sm:$0xff]
        %v253 = vld [vmem:[%s192 + $0xe0] sm:$0xff]
        %v254 = vld [vmem:[%s192 + $0xe8] sm:$0xff]
        %v255 = vld [vmem:[%s192 + $0xf0] sm:$0xff]
        %v256 = vld [vmem:[%s192 + $0xf8] sm:$0xff]
        %257 = vmatprep.subr.mxu0 0.0
        %258 = vmatpush1.msra.mxu0 %v225
        %259 = vmatprep.subr.mxu0 0.0
        %260 = vmatpush1.msra.mxu0 %v226
        %261 = vmatprep.subr.mxu0 0.0
        %262 = vmatpush1.msra.mxu0 %v227
        %263 = vmatprep.subr.mxu0 0.0
        %264 = vmatpush1.msra.mxu0 %v228
        %265 = vmatprep.subr.mxu0 0.0
        %266 = vmatpush1.msra.mxu0 %v229
        %267 = vmatprep.subr.mxu0 0.0
        %268 = vmatpush1.msra.mxu0 %v230
        %269 = vmatprep.subr.mxu0 0.0
        %270 = vmatpush1.msra.mxu0 %v231
        %271 = vmatprep.subr.mxu0 0.0
        %272 = vmatpush1.msra.mxu0 %v232
        %273 = vmatprep.subr.mxu0 0.0
        %274 = vmatpush1.msra.mxu0 %v233
        %275 = vmatprep.subr.mxu0 0.0
        %276 = vmatpush1.msra.mxu0 %v234
        %277 = vmatprep.subr.mxu0 0.0
        %278 = vmatpush1.msra.mxu0 %v235
        %279 = vmatprep.subr.mxu0 0.0
        %280 = vmatpush1.msra.mxu0 %v236
        %281 = vmatprep.subr.mxu0 0.0
        %282 = vmatpush1.msra.mxu0 %v237
        %283 = vmatprep.subr.mxu0 0.0
        %284 = vmatpush1.msra.mxu0 %v238
        %285 = vmatprep.subr.mxu0 0.0
        %286 = vmatpush1.msra.mxu0 %v239
        %287 = vmatprep.subr.mxu0 0.0
        %288 = vmatpush1.msra.mxu0 %v240
        %289 = vmatprep.subr.mxu0 0.0
        %290 = vmatpush1.msra.mxu0 %v241
        %291 = vmatprep.subr.mxu0 0.0
        %292 = vmatpush1.msra.mxu0 %v242
        %293 = vmatprep.subr.mxu0 0.0
        %294 = vmatpush1.msra.mxu0 %v243
        %295 = vmatprep.subr.mxu0 0.0
        %296 = vmatpush1.msra.mxu0 %v244
        %297 = vmatprep.subr.mxu0 0.0
        %298 = vmatpush1.msra.mxu0 %v245
        %299 = vmatprep.subr.mxu0 0.0
        %300 = vmatpush1.msra.mxu0 %v246
        %301 = vmatprep.subr.mxu0 0.0
        %302 = vmatpush1.msra.mxu0 %v247
        %303 = vmatprep.subr.mxu0 0.0
        %304 = vmatpush1.msra.mxu0 %v248
        %305 = vmatprep.subr.mxu0 0.0
        %306 = vmatpush1.msra.mxu0 %v249
        %307 = vmatprep.subr.mxu0 0.0
        %308 = vmatpush1.msra.mxu0 %v250
        %309 = vmatprep.subr.mxu0 0.0
        %310 = vmatpush1.msra.mxu0 %v251
        %311 = vmatprep.subr.mxu0 0.0
        %312 = vmatpush1.msra.mxu0 %v252
        %313 = vmatprep.subr.mxu0 0.0
        %314 = vmatpush1.msra.mxu0 %v253
        %315 = vmatprep.subr.mxu0 0.0
        %316 = vmatpush1.msra.mxu0 %v254
        %317 = vmatprep.subr.mxu0 0.0
        %318 = vmatpush1.msra.mxu0 %v255
        %319 = vmatprep.subr.mxu0 0.0
        %320 = vmatpush1.msra.mxu0 %v256
        %321 = vmatprep.mubr.f32.mxu0 %v224
        %322 = vmatmul.mubr.f32.gmra.mrb[0].mxu0 %v223
        %v323 = vpop.f32.mrb[0].mxu0
        %v324 = vadd.f32 0.0, %v323
        %v325 = vpop.f32.mrb[0].mxu0
        %326 = vdwg.mxu0
        %v327 = vadd.f32 %v222, %v324
        %328 = vst [vmem:[#allocation2] sm:$0xff] %v327
        %p329 = scmp.eq.s32.totalorder %s21, 2
        // Predicated region
        $region45: #{tpu_custom_call.1} parent=31 // pred_check
          %p330 = pneg %p329
        $region46: #{tpu_custom_call.1} parent=31 // pred_check_branch
          %332 = sbr.rel (%p330) target = $region48
        $region47: #{tpu_custom_call.1} parent=31 // pred_region
          %v333 = vld [vmem:[#allocation2] sm:$0xff]
          %v334 = vld [vmem:[%s2] sm:$0x1]
          %v336 = vlaneseq
          %v337 = vshrl.u32 %v336, 7
          %v338 = vsub.s32 0, %v337
          %v339 = vrot.slane %v334, %v338
          %v341 = vadd.f32 %v333, %v339
          %342 = vst [vmem:[#allocation8] sm:$0xff] %v341
        $region48: #{tpu_custom_call.1} parent=31 // pred_fallthru
          _
        // Predicated region
        $region49: #{tpu_custom_call.1} parent=31 // pred_check
          %p343 = pneg %p107
        $region50: #{tpu_custom_call.1} parent=31 // pred_check_branch
          %345 = sbr.rel (%p343) target = $region52
        $region51: #{tpu_custom_call.1} parent=31 // pred_region
          %s347 = ssub.s32 128, 128
          %348 = vsyncadd [#allocation5], %s347
          %s350 = sshll.u32 [#allocation8], 4
          %s351 = int_to_ptr.vmem [resolvable:$true] %s350
          %353 = dma.vmem_to_hbm [thread:$0]  %s351, 128, %s3, [#allocation5]
        $region52: #{tpu_custom_call.1} parent=31 // pred_fallthru
          _
        // Predicated region
        $region53: #{tpu_custom_call.1} parent=31 // pred_check
          %p354 = pneg %p107
        $region54: #{tpu_custom_call.1} parent=31 // pred_check_branch
          %356 = sbr.rel (%p354) target = $region56
        $region55: #{tpu_custom_call.1} parent=31 // pred_region
          %357 = dma.done [#allocation5], 128
        $region56: #{tpu_custom_call.1} parent=31 // pred_fallthru
          _
      $region32: #{tpu_custom_call.1} parent=5 // pred_fallthru
        _
      %p358 = scmp.le.s32.totalorder 2, %s16
      // Predicated region
      $region57: #{tpu_custom_call.1} parent=5 // pred_check
        %p359 = pneg %p358
      $region58: #{tpu_custom_call.1} parent=5 // pred_check_branch
        %361 = sbr.rel (%p359) target = $region60
      $region59: #{tpu_custom_call.1} parent=5 // pred_region
        %s362 = ssub.s32 %s16, 2
      $region60: #{tpu_custom_call.1} parent=5 // pred_fallthru
        _
    $region6: #{tpu_custom_call.1} parent=1 // loop_footer
      %s20 = sadd.s32 1, %s16
    $region7: #{tpu_custom_call.1} parent=1 // loop_footer_branch
      %15 = sbr.rel target = $region3
    $region8: #{tpu_custom_call.1} parent=1 // loop_exit
      _
    %363 = vsyncpa [#allocation4], 1
    %s364 = scalar_lea.sflag [#allocation4], 1
    %365 = vsyncpa %s364, 1
    %366 = vsyncpa [#allocation7], 1
    %s367 = scalar_lea.sflag [#allocation7], 1
    %368 = vsyncpa %s367, 1
    %369 = vsyncpa [#allocation5], 1
    %s370 = scalar_lea.sflag [#allocation5], 1
    %371 = vsyncpa %s370, 1

</llo_original>
